<compile_context>
chip_gen: v7x
topology: tpu7x:2x2x1
jax: 0.10.0
libtpu: 0.0.40
codegen_flags: <defaults>
</compile_context>

<pallas_src>
import math

import jax
import jax.numpy as jnp
from jax.experimental import pallas as pl
from jax.experimental.pallas import tpu as pltpu

LANE = 128          # TPU lane width
SUBLANE_BF16 = 16   # bf16 packs (16, 128) per vreg -> batch tiles aligned to 16


def _round_up(x: int, m: int) -> int:
    return ((x + m - 1) // m) * m


def _vmem_budget_bytes() -> int:
    """Physical VMEM capacity minus headroom (generation-aware, safe fallback)."""
    try:
        cap = int(pltpu.get_tpu_info().vmem_capacity_bytes)
    except Exception:
        cap = 64 << 20   # conservative default = v7x per-TC VMEM
    return max(cap - (12 << 20), 16 << 20)


# ----------------------------------------------------------------------------
# Pallas kernel: fused MLP over one batch tile (all layers, ReLU between)
# ----------------------------------------------------------------------------
def _make_mlp_kernel(num_layers: int):
    def kernel(x_ref, *refs):
        # refs = (w0, b0, w1, b1, ..., w_{L-1}, b_{L-1}, out_ref)
        out_ref = refs[-1]
        h = x_ref[...]                                   # (TB, in_p) bf16
        for i in range(num_layers):
            w = refs[2 * i][...]                          # (in_p_i, out_p_i) bf16, resident
            b = refs[2 * i + 1][...]                      # (1, out_p_i) f32
            hb = h if h.dtype == jnp.bfloat16 else h.astype(jnp.bfloat16)
            # bf16 operands -> MXU, f32 accumulation; bias add / ReLU stay f32 on the VPU.
            h = jnp.dot(hb, w, preferred_element_type=jnp.float32) + b
            if i < num_layers - 1:
                h = jnp.maximum(h, 0.0)                   # ReLU; dropout(p=0) = identity
        out_ref[...] = h.astype(out_ref.dtype)

    return kernel


# ----------------------------------------------------------------------------
# Parameters prepared ONCE (pad to lane multiples + cast to bf16) -- not per call
# ----------------------------------------------------------------------------
class PreparedDense:
    def __init__(self, weights, biases):
        assert len(weights) == len(biases) and len(weights) >= 1
        self.num_layers = len(weights)
        self.dims = [weights[0].shape[0]] + [w.shape[1] for w in weights]
        self.dims_p = [_round_up(d, LANE) for d in self.dims]
        flat = []
        for li, (w, b) in enumerate(zip(weights, biases)):
            fi, fo = w.shape
            fip, fop = self.dims_p[li], self.dims_p[li + 1]
            w_p = jnp.zeros((fip, fop), jnp.bfloat16).at[:fi, :fo].set(
                jnp.asarray(w).astype(jnp.bfloat16))
            b_p = jnp.zeros((1, fop), jnp.float32).at[:, :fo].set(
                jnp.reshape(jnp.asarray(b), (1, fo)).astype(jnp.float32))
            flat.extend([w_p, b_p])
        self.flat_params = flat
        self.param_bytes = sum(int(a.size) * a.dtype.itemsize for a in flat)


# ----------------------------------------------------------------------------
# Forward wrapper: tiling, padding (only when needed), pallas_call
# ----------------------------------------------------------------------------
def dense_network_forward(x, params: PreparedDense):
    """Fused MLP forward. x: (*b, in_size) -> (*b, out_size) float32."""
    *lead, in_size = x.shape
    assert in_size == params.dims[0], "input feature size mismatch"
    x2 = x.reshape((-1, in_size))
    batch = x2.shape[0]

    dims_p = params.dims_p
    in_p, out_p = dims_p[0], dims_p[-1]
    max_feat = max(dims_p)
    num_layers = params.num_layers
    vmem_budget = _vmem_budget_bytes()

    def footprint(tb: int, param_bufs: int) -> int:
        # resident params + double-buffered bf16 x tile + f32 out tile + live activations
        return (params.param_bytes * param_bufs
                + 2 * tb * in_p * 2
                + 2 * tb * out_p * 4
                + 2 * tb * max_feat * 4)

    # TODO(synk): N/K-tiled fallback when resident bf16 params alone exceed the VMEM
    # budget (very large hidden sizes on v7x's 64 MiB); current scheme assumes residency.
    batch16 = _round_up(batch, SUBLANE_BF16)
    if batch <= 32:
        TB = batch16                                   # single tile, latency-bound path
    else:
        # Cap TB at ~half the batch so grid >= 2 (v7x second TensorCore); pick the
        # largest candidate that fits the VMEM budget (v5e/v6e benefit from big tiles).
        tb_cap = max(SUBLANE_BF16, _round_up((batch16 + 1) // 2, SUBLANE_BF16))
        TB = SUBLANE_BF16
        for cand in (1024, 512, 256, 128, 64, 32, 16):
            if cand <= tb_cap and footprint(cand, 1) <= vmem_budget:
                TB = cand
                break
    batch_p = _round_up(batch, TB)
    num_tiles = batch_p // TB

    # Input: cast once to bf16; pad only if actually needed (single jnp.pad, no zeros+set).
    x_b = x2.astype(jnp.bfloat16)
    if batch_p != batch or in_p != in_size:
        x_b = jnp.pad(x_b, ((0, batch_p - batch), (0, in_p - in_size)))

    kernel = _make_mlp_kernel(num_layers)
    out_shape = jax.ShapeDtypeStruct((batch_p, out_p), jnp.float32)
    flops = 2 * batch_p * sum(a * b for a, b in zip(dims_p[:-1], dims_p[1:]))
    bytes_accessed = int(batch_p * in_p * 2 + params.param_bytes + batch_p * out_p * 4)
    cost = pl.CostEstimate(flops=int(flops), transcendentals=0,
                           bytes_accessed=bytes_accessed)

    if num_tiles == 1:
        # Small-batch path: whole problem resides in VMEM, no grid / pipeline machinery.
        vmem_limit = int(min(vmem_budget, max(16 << 20, footprint(TB, 1) + (8 << 20))))
        out = pl.pallas_call(
            kernel,
            out_shape=out_shape,
            compiler_params=pltpu.CompilerParams(vmem_limit_bytes=vmem_limit),
            cost_estimate=cost,
        )(x_b, *params.flat_params)
    else:
        def build(single_buffer_params: bool):
            pmode = pl.Buffered(1) if single_buffer_params else None
            param_bufs = 1 if single_buffer_params else 2

            def const_spec(shape):
                if pmode is None:
                    return pl.BlockSpec(shape, lambda i: (0, 0))
                return pl.BlockSpec(shape, lambda i: (0, 0), pipeline_mode=pmode)

            in_specs = [pl.BlockSpec((TB, in_p), lambda i: (i, 0))]
            for li in range(num_layers):
                fip, fop = dims_p[li], dims_p[li + 1]
                # Constant block index -> weights/biases stay resident (no re-DMA per step).
                in_specs.append(const_spec((fip, fop)))
                in_specs.append(const_spec((1, fop)))

            vmem_limit = int(min(vmem_budget,
                                 max(16 << 20, footprint(TB, param_bufs) + (8 << 20))))
            return pl.pallas_call(
                kernel,
                out_shape=out_shape,
                grid=(num_tiles,),
                in_specs=in_specs,
                out_specs=pl.BlockSpec((TB, out_p), lambda i: (i, 0)),
                compiler_params=pltpu.CompilerParams(
                    dimension_semantics=("parallel",),
                    vmem_limit_bytes=vmem_limit),
                cost_estimate=cost,
            )

        try:
            out = build(True)(x_b, *params.flat_params)
        except Exception:
            # Fallback: some lowerings may reject single-buffered (Buffered(1)) operands;
            # rebuild with default double buffering and a 2x-params VMEM budget.
            out = build(False)(x_b, *params.flat_params)

    out_size = params.dims[-1]
    return out[:batch, :out_size].reshape((*lead, out_size))


# ----------------------------------------------------------------------------
# Parameter init (mirrors nn.init.xavier_uniform_ with ReLU gain, bias = 0)
# ----------------------------------------------------------------------------
def init_params(key, in_size, hidden_sizes, out_size):
    features = [in_size] + list(hidden_sizes) + [out_size]
    gain = math.sqrt(2.0)  # nn.init.calculate_gain('relu')
    weights, biases = [], []
    for fan_in, fan_out in zip(features[:-1], features[1:]):
        key, sub = jax.random.split(key)
        bound = gain * math.sqrt(6.0 / (fan_in + fan_out))
        w = jax.random.uniform(sub, (fan_in, fan_out), jnp.float32, -bound, bound)
        b = jnp.zeros((1, fan_out), jnp.float32)
        weights.append(w)
        biases.append(b)
    return weights, biases


# ----------------------------------------------------------------------------
# Full forward (kernel hot path + glue: squeeze / optional pooling)
# ----------------------------------------------------------------------------
def dense_network(x, params: PreparedDense, pooling=None):
    y = dense_network_forward(x, params)
    y = jnp.squeeze(y, -1) if y.shape[-1] == 1 else y   # matches .squeeze(-1)
    if pooling is not None:
        # TODO(synk): fuse batch-dim pooling into the kernel (VMEM accumulator across
        # grid steps, 'arbitrary' batch axis) to skip the (batch, out) HBM round-trip.
        pool_type, dim = pooling["type"], pooling["dim"]
        pools = {
            None: lambda a: a,
            "mean": lambda a: jnp.mean(a, axis=dim),
            "max": lambda a: jnp.max(a, axis=dim),
            "min": lambda a: jnp.min(a, axis=dim),
            "sum": lambda a: jnp.sum(a, axis=dim),
        }
        y = pools[pool_type](y)
        nl = pooling.get("nonlinearity", None)
        if nl == "relu":
            y = jnp.maximum(y, 0.0)
        elif nl == "exp":
            y = jnp.exp(y)
        elif nl == "softplus":
            y = jax.nn.softplus(y)
        elif nl == "sigmoid":
            y = jax.nn.sigmoid(y)
    return y


if __name__ == "__main__":
    key = jax.random.PRNGKey(0)

    # Small shapes consistent with DenseNetwork(in_size, out_size, hidden_sizes)
    batch, in_size, hidden_sizes, out_size = 8, 16, [32, 32], 8

    pkey, xkey, xkey2 = jax.random.split(key, 3)
    weights, biases = init_params(pkey, in_size, hidden_sizes, out_size)
    params = PreparedDense(weights, biases)   # pad + bf16 cast ONCE (hoisted out of forward)
    x = jax.random.normal(xkey, (batch, in_size), jnp.float32)

    # Small batch -> single-tile, no-grid path.
    y = dense_network(x, params, pooling=None)
    y = jax.block_until_ready(y)
    assert y.shape == (batch, out_size)

    # Pure-JAX reference of the kernel math (bf16 MXU operands, f32 accumulation).
    def ref_bf16(xa):
        h = xa.astype(jnp.float32)
        for i, (w, b) in enumerate(zip(weights, biases)):
            h = jnp.dot(h.astype(jnp.bfloat16), w.astype(jnp.bfloat16),
                        preferred_element_type=jnp.float32) + b
            if i < len(weights) - 1:
                h = jnp.maximum(h, 0.0)
        return h

    assert jnp.allclose(y, ref_bf16(x), atol=2e-3, rtol=2e-3)

    # Full-precision sanity check (bf16 weights vs f32 reference, loose tolerance).
    h32 = x
    for i, (w, b) in enumerate(zip(weights, biases)):
        h32 = h32 @ w + b
        if i < len(weights) - 1:
            h32 = jnp.maximum(h32, 0.0)
    assert jnp.allclose(y, h32, atol=5e-2, rtol=5e-2)

    # Larger batch exercises the tiled, grid>=2 ("parallel") path.
    xb = jax.random.normal(xkey2, (96, in_size), jnp.float32)
    yb = jax.block_until_ready(dense_network(xb, params))
    assert yb.shape == (96, out_size)
    assert jnp.allclose(yb, ref_bf16(xb), atol=2e-3, rtol=2e-3)

    # Exercise the pooling epilogue path once (mean over batch + ReLU).
    y_pool = dense_network(x, params,
                           pooling={"type": "mean", "dim": 0, "nonlinearity": "relu"})
    y_pool = jax.block_until_ready(y_pool)
    assert y_pool.shape == (out_size,)

    print("KERNEL_OK")
</pallas_src>

<mosaic_0001>
module attributes {stable_mosaic.version = 11 : i64} {
  func.func @kernel(%arg0: memref<16x128xbf16, #tpu.memory_space<vmem>>, %arg1: memref<128x128xbf16, #tpu.memory_space<vmem>>, %arg2: memref<1x128xf32, #tpu.memory_space<vmem>>, %arg3: memref<128x128xbf16, #tpu.memory_space<vmem>>, %arg4: memref<1x128xf32, #tpu.memory_space<vmem>>, %arg5: memref<128x128xbf16, #tpu.memory_space<vmem>>, %arg6: memref<1x128xf32, #tpu.memory_space<vmem>>, %arg7: memref<16x128xf32, #tpu.memory_space<vmem>>) attributes {dimension_semantics = [], scalar_prefetch = 0 : i64, scratch_operands = 0 : i64, tpu.core_type = #tpu.core_type<tc>} {
    %c0 = arith.constant 0 : index
    %c0_0 = arith.constant 0 : index
    %0 = vector.load %arg0[%c0, %c0_0] : memref<16x128xbf16, #tpu.memory_space<vmem>>, vector<16x128xbf16>
    %c0_1 = arith.constant 0 : index
    %c0_2 = arith.constant 0 : index
    %1 = vector.load %arg1[%c0_1, %c0_2] : memref<128x128xbf16, #tpu.memory_space<vmem>>, vector<128x128xbf16>
    %c0_3 = arith.constant 0 : index
    %c0_4 = arith.constant 0 : index
    %2 = vector.load %arg2[%c0_3, %c0_4] : memref<1x128xf32, #tpu.memory_space<vmem>>, vector<1x128xf32>
    %cst = arith.constant dense<0.000000e+00> : vector<16x128xf32>
    %3 = tpu.matmul %0, %1, %cst {dimension_numbers = #tpu.dot_dimension_numbers<[1], [0], [0], [1], [0, 0, 1, 1], [], []>} : vector<16x128xbf16>, vector<128x128xbf16>, vector<16x128xf32> -> vector<16x128xf32>
    %4 = vector.broadcast %2 : vector<1x128xf32> to vector<16x128xf32>
    %5 = arith.addf %3, %4 : vector<16x128xf32>
    %cst_5 = arith.constant 0.000000e+00 : f32
    %6 = vector.broadcast %cst_5 : f32 to vector<16x128xf32>
    %7 = arith.maximumf %5, %6 : vector<16x128xf32>
    %c0_6 = arith.constant 0 : index
    %c0_7 = arith.constant 0 : index
    %8 = vector.load %arg3[%c0_6, %c0_7] : memref<128x128xbf16, #tpu.memory_space<vmem>>, vector<128x128xbf16>
    %c0_8 = arith.constant 0 : index
    %c0_9 = arith.constant 0 : index
    %9 = vector.load %arg4[%c0_8, %c0_9] : memref<1x128xf32, #tpu.memory_space<vmem>>, vector<1x128xf32>
    %10 = arith.truncf %7 : vector<16x128xf32> to vector<16x128xbf16>
    %cst_10 = arith.constant dense<0.000000e+00> : vector<16x128xf32>
    %11 = tpu.matmul %10, %8, %cst_10 {dimension_numbers = #tpu.dot_dimension_numbers<[1], [0], [0], [1], [0, 0, 1, 1], [], []>} : vector<16x128xbf16>, vector<128x128xbf16>, vector<16x128xf32> -> vector<16x128xf32>
    %12 = vector.broadcast %9 : vector<1x128xf32> to vector<16x128xf32>
    %13 = arith.addf %11, %12 : vector<16x128xf32>
    %cst_11 = arith.constant 0.000000e+00 : f32
    %14 = vector.broadcast %cst_11 : f32 to vector<16x128xf32>
    %15 = arith.maximumf %13, %14 : vector<16x128xf32>
    %c0_12 = arith.constant 0 : index
    %c0_13 = arith.constant 0 : index
    %16 = vector.load %arg5[%c0_12, %c0_13] : memref<128x128xbf16, #tpu.memory_space<vmem>>, vector<128x128xbf16>
    %c0_14 = arith.constant 0 : index
    %c0_15 = arith.constant 0 : index
    %17 = vector.load %arg6[%c0_14, %c0_15] : memref<1x128xf32, #tpu.memory_space<vmem>>, vector<1x128xf32>
    %18 = arith.truncf %15 : vector<16x128xf32> to vector<16x128xbf16>
    %cst_16 = arith.constant dense<0.000000e+00> : vector<16x128xf32>
    %19 = tpu.matmul %18, %16, %cst_16 {dimension_numbers = #tpu.dot_dimension_numbers<[1], [0], [0], [1], [0, 0, 1, 1], [], []>} : vector<16x128xbf16>, vector<128x128xbf16>, vector<16x128xf32> -> vector<16x128xf32>
    %20 = vector.broadcast %17 : vector<1x128xf32> to vector<16x128xf32>
    %21 = arith.addf %19, %20 : vector<16x128xf32>
    %c0_17 = arith.constant 0 : index
    %c0_18 = arith.constant 0 : index
    %22 = vector.load %arg7[%c0_17, %c0_18] : memref<16x128xf32, #tpu.memory_space<vmem>>, vector<16x128xf32>
    tpu.vector_store %arg7[%c0_17, %c0_18], %21 {strides = array<i32>} : memref<16x128xf32, #tpu.memory_space<vmem>>, vector<16x128xf32>,
    return
  }
}

</mosaic_0001>

<llo_original>
// kernel: tpu_custom_call.1
$region0: #{tpu_custom_call.1}
  #allocation0 [shape = 'u32[]', space=smem, size = 0x4, offset = 0x4, fixed_abs, tag = 'smem constant byte address 0x4 - core index']
  #allocation1 [shape = 'u32[144,128]{1,0:T(1,128)}', space=vmem, size = 0x12000, scoped, tag = 'internal scratch']
  %s0 = inlined_call_operand.hbm [shape: bf16[16,128], index: 0, kind: input, shape index: {}]
  %s1 = inlined_call_operand.hbm [shape: bf16[128,128], index: 1, kind: input, shape index: {}]
  %s2 = inlined_call_operand.vmem [shape: f32[1,128], index: 2, kind: input, shape index: {}]
  %s3 = inlined_call_operand.hbm [shape: bf16[128,128], index: 3, kind: input, shape index: {}]
  %s4 = inlined_call_operand.vmem [shape: f32[1,128], index: 4, kind: input, shape index: {}]
  %s5 = inlined_call_operand.hbm [shape: bf16[128,128], index: 5, kind: input, shape index: {}]
  %s6 = inlined_call_operand.vmem [shape: f32[1,128], index: 6, kind: input, shape index: {}]
  %s7 = inlined_call_operand.hbm [shape: f32[16,128], index: 7, kind: output, shape index: {}]
  %s8 = sld [smem:[#allocation0]]
  $region54: #{tpu_custom_call.1} parent=0
    _
  %s10 = ssub.s32 1, %s8
  %s11 = scalar_select 0, %s10, %s8
  $region1: #{tpu_custom_call.1} parent=0
    #allocation2 [shape = 'u8[4096]{0}', space=vmem, size = 0x1000, scoped, tag = 'input window, operand 0, single buffered']
    #allocation3 [shape = 's32[1]{0}', space=sflag, size = 0x4, scoped, tag = 'scoped memory for tpu_custom_call.1']
    #allocation4 [shape = 's32[1]{0}', space=sflag, size = 0x4, scoped, tag = 'scoped memory for tpu_custom_call.1']
    #allocation5 [shape = 'u8[32768]{0}', space=vmem, size = 0x8000, scoped, tag = 'input window, operand 1, single buffered']
    #allocation6 [shape = 's32[1]{0}', space=sflag, size = 0x4, scoped, tag = 'scoped memory for tpu_custom_call.1']
    #allocation7 [shape = 'u8[32768]{0}', space=vmem, size = 0x8000, scoped, tag = 'input window, operand 3, single buffered']
    #allocation8 [shape = 'u8[32768]{0}', space=vmem, size = 0x8000, scoped, tag = 'input window, operand 5, single buffered']
    #allocation9 [shape = 's32[1]{0}', space=sflag, size = 0x4, scoped, tag = 'scoped memory for tpu_custom_call.1']
    #allocation10 [shape = 'u8[8192]{0}', space=vmem, size = 0x2000, scoped, tag = 'output window, operand 0, single buffered']
    %12 = vsyncpa [#allocation3], 0
    %13 = vsyncpa [#allocation6], 0
    %14 = vsyncpa [#allocation9], 0
    %15 = vsyncpa [#allocation4], 0
    // Predicated region
    $region2: #{tpu_custom_call.1} parent=1 // pred_check
      _
    $region3: #{tpu_custom_call.1} parent=1 // pred_check_branch
      %17 = sbr.rel (0) target = $region5
    $region4: #{tpu_custom_call.1} parent=1 // pred_region
      %s19 = ssub.s32 128, 128
      %20 = vsyncadd [#allocation3], %s19
      %s21 = sshll.u32 [#allocation2], 4
      %s22 = int_to_ptr.vmem [resolvable:$true] %s21
      %27 = dma.hbm_to_vmem [thread:$0]  %s0, 128, %s22, [#allocation3], 64, 64, 4
    $region5: #{tpu_custom_call.1} parent=1 // pred_fallthru
      _
    // Predicated region
    $region6: #{tpu_custom_call.1} parent=1 // pred_check
      _
    $region7: #{tpu_custom_call.1} parent=1 // pred_check_branch
      %29 = sbr.rel (0) target = $region9
    $region8: #{tpu_custom_call.1} parent=1 // pred_region
      %s31 = ssub.s32 1024, 1024
      %32 = vsyncadd [#allocation6], %s31
      %s33 = sshll.u32 [#allocation5], 4
      %s34 = int_to_ptr.vmem [resolvable:$true] %s33
      %39 = dma.hbm_to_vmem [thread:$0]  %s1, 1024, %s34, [#allocation6], 64, 64, 4
    $region9: #{tpu_custom_call.1} parent=1 // pred_fallthru
      _
    // Predicated region
    $region10: #{tpu_custom_call.1} parent=1 // pred_check
      _
    $region11: #{tpu_custom_call.1} parent=1 // pred_check_branch
      %41 = sbr.rel (0) target = $region13
    $region12: #{tpu_custom_call.1} parent=1 // pred_region
      _
    $region13: #{tpu_custom_call.1} parent=1 // pred_fallthru
      _
    // Predicated region
    $region14: #{tpu_custom_call.1} parent=1 // pred_check
      _
    $region15: #{tpu_custom_call.1} parent=1 // pred_check_branch
      %43 = sbr.rel (0) target = $region17
    $region16: #{tpu_custom_call.1} parent=1 // pred_region
      %s45 = ssub.s32 1024, 1024
      %46 = vsyncadd [#allocation6], %s45
      %s47 = sshll.u32 [#allocation7], 4
      %s48 = int_to_ptr.vmem [resolvable:$true] %s47
      %53 = dma.hbm_to_vmem [thread:$0]  %s3, 1024, %s48, [#allocation6], 64, 64, 4
    $region17: #{tpu_custom_call.1} parent=1 // pred_fallthru
      _
    // Predicated region
    $region18: #{tpu_custom_call.1} parent=1 // pred_check
      _
    $region19: #{tpu_custom_call.1} parent=1 // pred_check_branch
      %55 = sbr.rel (0) target = $region21
    $region20: #{tpu_custom_call.1} parent=1 // pred_region
      _
    $region21: #{tpu_custom_call.1} parent=1 // pred_fallthru
      _
    // Predicated region
    $region22: #{tpu_custom_call.1} parent=1 // pred_check
      _
    $region23: #{tpu_custom_call.1} parent=1 // pred_check_branch
      %57 = sbr.rel (0) target = $region25
    $region24: #{tpu_custom_call.1} parent=1 // pred_region
      %s59 = ssub.s32 1024, 1024
      %60 = vsyncadd [#allocation9], %s59
      %s61 = sshll.u32 [#allocation8], 4
      %s62 = int_to_ptr.vmem [resolvable:$true] %s61
      %67 = dma.hbm_to_vmem [thread:$0]  %s5, 1024, %s62, [#allocation9], 64, 64, 4
    $region25: #{tpu_custom_call.1} parent=1 // pred_fallthru
      _
    // Predicated region
    $region26: #{tpu_custom_call.1} parent=1 // pred_check
      _
    $region27: #{tpu_custom_call.1} parent=1 // pred_check_branch
      %69 = sbr.rel (0) target = $region29
    $region28: #{tpu_custom_call.1} parent=1 // pred_region
      _
    $region29: #{tpu_custom_call.1} parent=1 // pred_fallthru
      _
    // Predicated region
    $region30: #{tpu_custom_call.1} parent=1 // pred_check
      _
    $region31: #{tpu_custom_call.1} parent=1 // pred_check_branch
      %71 = sbr.rel (0) target = $region33
    $region32: #{tpu_custom_call.1} parent=1 // pred_region
      %72 = dma.done [#allocation3], 128
    $region33: #{tpu_custom_call.1} parent=1 // pred_fallthru
      _
    // Predicated region
    $region34: #{tpu_custom_call.1} parent=1 // pred_check
      _
    $region35: #{tpu_custom_call.1} parent=1 // pred_check_branch
      %74 = sbr.rel (0) target = $region37
    $region36: #{tpu_custom_call.1} parent=1 // pred_region
      %75 = dma.done [#allocation6], 1024
    $region37: #{tpu_custom_call.1} parent=1 // pred_fallthru
      _
    // Predicated region
    $region38: #{tpu_custom_call.1} parent=1 // pred_check
      _
    $region39: #{tpu_custom_call.1} parent=1 // pred_check_branch
      %77 = sbr.rel (0) target = $region41
    $region40: #{tpu_custom_call.1} parent=1 // pred_region
      %78 = dma.done [#allocation6], 1024
    $region41: #{tpu_custom_call.1} parent=1 // pred_fallthru
      _
    // Predicated region
    $region42: #{tpu_custom_call.1} parent=1 // pred_check
      _
    $region43: #{tpu_custom_call.1} parent=1 // pred_check_branch
      %80 = sbr.rel (0) target = $region45
    $region44: #{tpu_custom_call.1} parent=1 // pred_region
      %81 = dma.done [#allocation9], 1024
    $region45: #{tpu_custom_call.1} parent=1 // pred_fallthru
      _
    %v83 = vld [vmem:[#allocation2] sm:$0xf]
    %v84 = vld [vmem:[#allocation2 + $0x4] sm:$0xf]
    %v85 = vld [vmem:[#allocation5] sm:$0xf]
    %v86 = vld [vmem:[#allocation5 + $0x4] sm:$0xf]
    %v87 = vld [vmem:[#allocation5 + $0x8] sm:$0xf]
    %v88 = vld [vmem:[#allocation5 + $0xc] sm:$0xf]
    %v89 = vld [vmem:[#allocation5 + $0x10] sm:$0xf]
    %v90 = vld [vmem:[#allocation5 + $0x14] sm:$0xf]
    %v91 = vld [vmem:[#allocation5 + $0x18] sm:$0xf]
    %v92 = vld [vmem:[#allocation5 + $0x1c] sm:$0xf]
    %v93 = vld [vmem:[#allocation5 + $0x20] sm:$0xf]
    %v94 = vld [vmem:[#allocation5 + $0x24] sm:$0xf]
    %v95 = vld [vmem:[#allocation5 + $0x28] sm:$0xf]
    %v96 = vld [vmem:[#allocation5 + $0x2c] sm:$0xf]
    %v97 = vld [vmem:[#allocation5 + $0x30] sm:$0xf]
    %v98 = vld [vmem:[#allocation5 + $0x34] sm:$0xf]
    %v99 = vld [vmem:[#allocation5 + $0x38] sm:$0xf]
    %v100 = vld [vmem:[#allocation5 + $0x3c] sm:$0xf]
    %v101 = vld [vmem:[%s2] sm:$0x1]
    %v103 = vlaneseq
    %v104 = vshrl.u32 %v103, 7
    %v105 = vsub.s32 0, %v104
    %v106 = vrot.slane %v101, %v105
    %v110 = vunpack.c.l.b16 %v83
    %v111 = vunpack.c.l.b16 %v84
    %v112 = vpack.c.b16 %v111, %v110
    %v130 = vunpack.c.l.b16 %v85
    %v131 = vunpack.c.l.b16 %v86
    %v132 = vunpack.c.l.b16 %v87
    %v133 = vunpack.c.l.b16 %v88
    %v134 = vunpack.c.l.b16 %v89
    %v135 = vunpack.c.l.b16 %v90
    %v136 = vunpack.c.l.b16 %v91
    %v137 = vunpack.c.l.b16 %v92
    %v138 = vunpack.c.l.b16 %v93
    %v139 = vunpack.c.l.b16 %v94
    %v140 = vunpack.c.l.b16 %v95
    %v141 = vunpack.c.l.b16 %v96
    %v142 = vunpack.c.l.b16 %v97
    %v143 = vunpack.c.l.b16 %v98
    %v144 = vunpack.c.l.b16 %v99
    %v145 = vunpack.c.l.b16 %v100
    %v146 = vpack.c.b16 %v131, %v130
    %v147 = vpack.c.b16 %v133, %v132
    %v148 = vpack.c.b16 %v135, %v134
    %v149 = vpack.c.b16 %v137, %v136
    %v150 = vpack.c.b16 %v139, %v138
    %v151 = vpack.c.b16 %v141, %v140
    %v152 = vpack.c.b16 %v143, %v142
    %v153 = vpack.c.b16 %v145, %v144
    %162 = vmatprep.subr.bf16.mxu0 0
    %163 = vmatpush1.bf16.msra.mxu0 %v146
    %164 = vmatprep.subr.bf16.mxu0 0
    %165 = vmatpush1.bf16.msra.mxu0 %v147
    %166 = vmatprep.subr.bf16.mxu0 0
    %167 = vmatpush1.bf16.msra.mxu0 %v148
    %168 = vmatprep.subr.bf16.mxu0 0
    %169 = vmatpush1.bf16.msra.mxu0 %v149
    %170 = vmatprep.subr.bf16.mxu0 0
    %171 = vmatpush1.bf16.msra.mxu0 %v150
    %172 = vmatprep.subr.bf16.mxu0 0
    %173 = vmatpush1.bf16.msra.mxu0 %v151
    %174 = vmatprep.subr.bf16.mxu0 0
    %175 = vmatpush1.bf16.msra.mxu0 %v152
    %176 = vmatprep.subr.bf16.mxu0 0
    %177 = vmatpush1.bf16.msra.mxu0 %v153
    %178 = vmatprep.subr.bf16.mxu0 0
    %179 = vmatpush1.bf16.msra.mxu0 0
    %180 = vmatprep.subr.bf16.mxu0 0
    %181 = vmatpush1.bf16.msra.mxu0 0
    %182 = vmatprep.subr.bf16.mxu0 0
    %183 = vmatpush1.bf16.msra.mxu0 0
    %184 = vmatprep.subr.bf16.mxu0 0
    %185 = vmatpush1.bf16.msra.mxu0 0
    %186 = vmatprep.subr.bf16.mxu0 0
    %187 = vmatpush1.bf16.msra.mxu0 0
    %188 = vmatprep.subr.bf16.mxu0 0
    %189 = vmatpush1.bf16.msra.mxu0 0
    %190 = vmatprep.subr.bf16.mxu0 0
    %191 = vmatpush1.bf16.msra.mxu0 0
    %192 = vmatprep.subr.bf16.mxu0 0
    %193 = vmatpush1.bf16.msra.mxu0 0
    %194 = vmatprep.mubr.bf16.mxu0 0
    %195 = vmatmul.mubr.bf16.gmra.mrb[0].mxu0 %v112
    %v196 = vpop.f32.mrb[0].mxu0
    %v197 = vadd.f32 %v106, %v196
    %v198 = vpop.f32.mrb[0].mxu0
    %v199 = vpop.f32.mrb[0].mxu0
    %v200 = vadd.f32 %v106, %v199
    %v201 = vpop.f32.mrb[0].mxu0
    %202 = vdwg.mxu0
    %v203 = vmax.f32 %v197, 0.0
    %v204 = vmax.f32 %v200, 0.0
    %v205 = vld [vmem:[#allocation7] sm:$0xf]
    %v206 = vld [vmem:[#allocation7 + $0x4] sm:$0xf]
    %v207 = vld [vmem:[#allocation7 + $0x8] sm:$0xf]
    %v208 = vld [vmem:[#allocation7 + $0xc] sm:$0xf]
    %v209 = vld [vmem:[#allocation7 + $0x10] sm:$0xf]
    %v210 = vld [vmem:[#allocation7 + $0x14] sm:$0xf]
    %v211 = vld [vmem:[#allocation7 + $0x18] sm:$0xf]
    %v212 = vld [vmem:[#allocation7 + $0x1c] sm:$0xf]
    %v213 = vld [vmem:[#allocation7 + $0x20] sm:$0xf]
    %v214 = vld [vmem:[#allocation7 + $0x24] sm:$0xf]
    %v215 = vld [vmem:[#allocation7 + $0x28] sm:$0xf]
    %v216 = vld [vmem:[#allocation7 + $0x2c] sm:$0xf]
    %v217 = vld [vmem:[#allocation7 + $0x30] sm:$0xf]
    %v218 = vld [vmem:[#allocation7 + $0x34] sm:$0xf]
    %v219 = vld [vmem:[#allocation7 + $0x38] sm:$0xf]
    %v220 = vld [vmem:[#allocation7 + $0x3c] sm:$0xf]
    %v221 = vld [vmem:[%s4] sm:$0x1]
    %v222 = vpack.c.bf16 %v204, %v203
    %v224 = vlaneseq
    %v225 = vshrl.u32 %v224, 7
    %v226 = vsub.s32 0, %v225
    %v227 = vrot.slane %v221, %v226
    %v245 = vunpack.c.l.b16 %v205
    %v246 = vunpack.c.l.b16 %v206
    %v247 = vunpack.c.l.b16 %v207
    %v248 = vunpack.c.l.b16 %v208
    %v249 = vunpack.c.l.b16 %v209
    %v250 = vunpack.c.l.b16 %v210
    %v251 = vunpack.c.l.b16 %v211
    %v252 = vunpack.c.l.b16 %v212
    %v253 = vunpack.c.l.b16 %v213
    %v254 = vunpack.c.l.b16 %v214
    %v255 = vunpack.c.l.b16 %v215
    %v256 = vunpack.c.l.b16 %v216
    %v257 = vunpack.c.l.b16 %v217
    %v258 = vunpack.c.l.b16 %v218
    %v259 = vunpack.c.l.b16 %v219
    %v260 = vunpack.c.l.b16 %v220
    %v261 = vpack.c.b16 %v246, %v245
    %v262 = vpack.c.b16 %v248, %v247
    %v263 = vpack.c.b16 %v250, %v249
    %v264 = vpack.c.b16 %v252, %v251
    %v265 = vpack.c.b16 %v254, %v253
    %v266 = vpack.c.b16 %v256, %v255
    %v267 = vpack.c.b16 %v258, %v257
    %v268 = vpack.c.b16 %v260, %v259
    %277 = vmatprep.subr.bf16.mxu0 0
    %278 = vmatpush1.bf16.msra.mxu0 %v261
    %279 = vmatprep.subr.bf16.mxu0 0
    %280 = vmatpush1.bf16.msra.mxu0 %v262
    %281 = vmatprep.subr.bf16.mxu0 0
    %282 = vmatpush1.bf16.msra.mxu0 %v263
    %283 = vmatprep.subr.bf16.mxu0 0
    %284 = vmatpush1.bf16.msra.mxu0 %v264
    %285 = vmatprep.subr.bf16.mxu0 0
    %286 = vmatpush1.bf16.msra.mxu0 %v265
    %287 = vmatprep.subr.bf16.mxu0 0
    %288 = vmatpush1.bf16.msra.mxu0 %v266
    %289 = vmatprep.subr.bf16.mxu0 0
    %290 = vmatpush1.bf16.msra.mxu0 %v267
    %291 = vmatprep.subr.bf16.mxu0 0
    %292 = vmatpush1.bf16.msra.mxu0 %v268
    %293 = vmatprep.subr.bf16.mxu0 0
    %294 = vmatpush1.bf16.msra.mxu0 0
    %295 = vmatprep.subr.bf16.mxu0 0
    %296 = vmatpush1.bf16.msra.mxu0 0
    %297 = vmatprep.subr.bf16.mxu0 0
    %298 = vmatpush1.bf16.msra.mxu0 0
    %299 = vmatprep.subr.bf16.mxu0 0
    %300 = vmatpush1.bf16.msra.mxu0 0
    %301 = vmatprep.subr.bf16.mxu0 0
    %302 = vmatpush1.bf16.msra.mxu0 0
    %303 = vmatprep.subr.bf16.mxu0 0
    %304 = vmatpush1.bf16.msra.mxu0 0
    %305 = vmatprep.subr.bf16.mxu0 0
    %306 = vmatpush1.bf16.msra.mxu0 0
    %307 = vmatprep.subr.bf16.mxu0 0
    %308 = vmatpush1.bf16.msra.mxu0 0
    %309 = vmatprep.mubr.bf16.mxu0 0
    %310 = vmatmul.mubr.bf16.gmra.mrb[0].mxu0 %v222
    %v311 = vpop.f32.mrb[0].mxu0
    %v312 = vadd.f32 %v227, %v311
    %v313 = vpop.f32.mrb[0].mxu0
    %v314 = vpop.f32.mrb[0].mxu0
    %v315 = vadd.f32 %v227, %v314
    %v316 = vpop.f32.mrb[0].mxu0
    %317 = vdwg.mxu0
    %v318 = vmax.f32 %v312, 0.0
    %v319 = vmax.f32 %v315, 0.0
    %v320 = vld [vmem:[#allocation8] sm:$0xf]
    %v321 = vld [vmem:[#allocation8 + $0x4] sm:$0xf]
    %v322 = vld [vmem:[#allocation8 + $0x8] sm:$0xf]
    %v323 = vld [vmem:[#allocation8 + $0xc] sm:$0xf]
    %v324 = vld [vmem:[#allocation8 + $0x10] sm:$0xf]
    %v325 = vld [vmem:[#allocation8 + $0x14] sm:$0xf]
    %v326 = vld [vmem:[#allocation8 + $0x18] sm:$0xf]
    %v327 = vld [vmem:[#allocation8 + $0x1c] sm:$0xf]
    %v328 = vld [vmem:[#allocation8 + $0x20] sm:$0xf]
    %v329 = vld [vmem:[#allocation8 + $0x24] sm:$0xf]
    %v330 = vld [vmem:[#allocation8 + $0x28] sm:$0xf]
    %v331 = vld [vmem:[#allocation8 + $0x2c] sm:$0xf]
    %v332 = vld [vmem:[#allocation8 + $0x30] sm:$0xf]
    %v333 = vld [vmem:[#allocation8 + $0x34] sm:$0xf]
    %v334 = vld [vmem:[#allocation8 + $0x38] sm:$0xf]
    %v335 = vld [vmem:[#allocation8 + $0x3c] sm:$0xf]
    %v336 = vld [vmem:[%s6] sm:$0x1]
    %v337 = vpack.c.bf16 %v319, %v318
    %v339 = vlaneseq
    %v340 = vshrl.u32 %v339, 7
    %v341 = vsub.s32 0, %v340
    %v342 = vrot.slane %v336, %v341
    %v360 = vunpack.c.l.b16 %v320
    %v361 = vunpack.c.l.b16 %v321
    %v362 = vunpack.c.l.b16 %v322
    %v363 = vunpack.c.l.b16 %v323
    %v364 = vunpack.c.l.b16 %v324
    %v365 = vunpack.c.l.b16 %v325
    %v366 = vunpack.c.l.b16 %v326
    %v367 = vunpack.c.l.b16 %v327
    %v368 = vunpack.c.l.b16 %v328
    %v369 = vunpack.c.l.b16 %v329
    %v370 = vunpack.c.l.b16 %v330
    %v371 = vunpack.c.l.b16 %v331
    %v372 = vunpack.c.l.b16 %v332
    %v373 = vunpack.c.l.b16 %v333
    %v374 = vunpack.c.l.b16 %v334
    %v375 = vunpack.c.l.b16 %v335
    %v376 = vpack.c.b16 %v361, %v360
    %v377 = vpack.c.b16 %v363, %v362
    %v378 = vpack.c.b16 %v365, %v364
    %v379 = vpack.c.b16 %v367, %v366
    %v380 = vpack.c.b16 %v369, %v368
    %v381 = vpack.c.b16 %v371, %v370
    %v382 = vpack.c.b16 %v373, %v372
    %v383 = vpack.c.b16 %v375, %v374
    %392 = vmatprep.subr.bf16.mxu0 0
    %393 = vmatpush1.bf16.msra.mxu0 %v376
    %394 = vmatprep.subr.bf16.mxu0 0
    %395 = vmatpush1.bf16.msra.mxu0 %v377
    %396 = vmatprep.subr.bf16.mxu0 0
    %397 = vmatpush1.bf16.msra.mxu0 %v378
    %398 = vmatprep.subr.bf16.mxu0 0
    %399 = vmatpush1.bf16.msra.mxu0 %v379
    %400 = vmatprep.subr.bf16.mxu0 0
    %401 = vmatpush1.bf16.msra.mxu0 %v380
    %402 = vmatprep.subr.bf16.mxu0 0
    %403 = vmatpush1.bf16.msra.mxu0 %v381
    %404 = vmatprep.subr.bf16.mxu0 0
    %405 = vmatpush1.bf16.msra.mxu0 %v382
    %406 = vmatprep.subr.bf16.mxu0 0
    %407 = vmatpush1.bf16.msra.mxu0 %v383
    %408 = vmatprep.subr.bf16.mxu0 0
    %409 = vmatpush1.bf16.msra.mxu0 0
    %410 = vmatprep.subr.bf16.mxu0 0
    %411 = vmatpush1.bf16.msra.mxu0 0
    %412 = vmatprep.subr.bf16.mxu0 0
    %413 = vmatpush1.bf16.msra.mxu0 0
    %414 = vmatprep.subr.bf16.mxu0 0
    %415 = vmatpush1.bf16.msra.mxu0 0
    %416 = vmatprep.subr.bf16.mxu0 0
    %417 = vmatpush1.bf16.msra.mxu0 0
    %418 = vmatprep.subr.bf16.mxu0 0
    %419 = vmatpush1.bf16.msra.mxu0 0
    %420 = vmatprep.subr.bf16.mxu0 0
    %421 = vmatpush1.bf16.msra.mxu0 0
    %422 = vmatprep.subr.bf16.mxu0 0
    %423 = vmatpush1.bf16.msra.mxu0 0
    %424 = vmatprep.mubr.bf16.mxu0 0
    %425 = vmatmul.mubr.bf16.gmra.mrb[0].mxu0 %v337
    %v426 = vpop.f32.mrb[0].mxu0
    %v427 = vadd.f32 %v342, %v426
    %v428 = vpop.f32.mrb[0].mxu0
    %v429 = vpop.f32.mrb[0].mxu0
    %v430 = vadd.f32 %v342, %v429
    %v431 = vpop.f32.mrb[0].mxu0
    %432 = vdwg.mxu0
    %433 = vst [vmem:[#allocation10] sm:$0xff] %v427
    %434 = vst [vmem:[#allocation10 + $0x8] sm:$0xff] %v430
    // Predicated region
    $region46: #{tpu_custom_call.1} parent=1 // pred_check
      _
    $region47: #{tpu_custom_call.1} parent=1 // pred_check_branch
      %436 = sbr.rel (0) target = $region49
    $region48: #{tpu_custom_call.1} parent=1 // pred_region
      %s438 = ssub.s32 256, 256
      %439 = vsyncadd [#allocation4], %s438
      %s440 = sshll.u32 [#allocation10], 4
      %s441 = int_to_ptr.vmem [resolvable:$true] %s440
      %446 = dma.vmem_to_hbm [thread:$0]  %s441, 256, %s7, [#allocation4], 128, 128, 8
    $region49: #{tpu_custom_call.1} parent=1 // pred_fallthru
      _
    // Predicated region
    $region50: #{tpu_custom_call.1} parent=1 // pred_check
      _
    $region51: #{tpu_custom_call.1} parent=1 // pred_check_branch
      %448 = sbr.rel (0) target = $region53
    $region52: #{tpu_custom_call.1} parent=1 // pred_region
      %449 = dma.done [#allocation4], 256
    $region53: #{tpu_custom_call.1} parent=1 // pred_fallthru
      _
    %450 = vsyncpa [#allocation3], 1
    %451 = vsyncpa [#allocation6], 1
    %452 = vsyncpa [#allocation9], 1
    %453 = vsyncpa [#allocation4], 1

</llo_original>
